<compile_context>
chip_gen: v7x
topology: tpu7x:2x2x1
jax: 0.10.0
libtpu: 0.0.40
codegen_flags: <defaults>
</compile_context>

<pallas_src>
import functools

import jax
import jax.numpy as jnp
from jax import lax
from jax.experimental import pallas as pl
from jax.experimental.pallas import tpu as pltpu


def _sdpa_kernel(*refs, scale, matmul_dtype, has_mask):
    if has_mask:
        q_ref, k_ref, v_ref, mask_ref, out_ref, attn_ref = refs
    else:
        q_ref, k_ref, v_ref, out_ref, attn_ref = refs

    # Fold 1/sqrt(d) into the small (tq, D) q tile instead of the (tq, Sk) score.
    q = (q_ref[0] * scale).astype(matmul_dtype)   # (tq, D)
    k = k_ref[0].astype(matmul_dtype)             # (Sk, D)
    v = v_ref[0].astype(matmul_dtype)             # (Sk, D)

    # score[i, j] = sum_d q[i, d] * k[j, d] -- native contraction, no k.T (XLU).
    score = lax.dot_general(
        q, k, dimension_numbers=(((1,), (1,)), ((), ())),
        preferred_element_type=jnp.float32)       # (tq, Sk) f32

    if has_mask:
        score = score + mask_ref[0, 0]

    # numerically stable softmax over the key axis
    m = jnp.max(score, axis=-1, keepdims=True)
    e = jnp.exp(score - m)
    s = jnp.sum(e, axis=-1, keepdims=True)
    inv = pl.reciprocal(s, approx=True)           # EUP slot; frees VALU
    w = e * inv                                   # (tq, Sk)

    attn_ref[0] = w.astype(attn_ref.dtype)

    out = lax.dot_general(
        w.astype(matmul_dtype), v,
        dimension_numbers=(((1,), (0,)), ((), ())),
        preferred_element_type=jnp.float32)       # (tq, D) f32
    # NOTE: out block last dim = D; for production shapes with D < 128, packing
    # heads into a lane-dense (>=128) last dim would avoid masked vst stores,
    # but the dominant output here is the (tq, Sk) weights slab (already lane-dense).
    out_ref[0] = out.astype(out_ref.dtype)


def _choose_q_tile(sq, sk, d, has_mask, itemsize=4, budget=12 << 20):
    """Largest q tile whose double-buffered blocks fit a conservative VMEM
    budget (safe under the default scoped-VMEM limit on v5e/v6e/v7x)."""
    def block_bytes(tq):
        per_step = (2 * tq * d                        # q in + out blocks
                    + 2 * sk * d                      # full-Sk k and v blocks
                    + (1 + int(has_mask)) * tq * sk)  # attn out (+ mask in)
        return 2 * per_step * itemsize                # double-buffered pipeline
    candidates = [sq] + [t for t in (1024, 512, 256, 128, 64, 32, 16, 8)
                         if t < sq and sq % t == 0]
    for tq in candidates:
        if block_bytes(tq) <= budget:
            return tq
    return candidates[-1]


@functools.partial(jax.jit, static_argnames=("has_mask", "matmul_dtype"))
def _sdpa_pallas(q, k, v, mask, has_mask, matmul_dtype):
    B, H, Sq, D = q.shape
    Sk = k.shape[2]

    # Fold batch and heads into one leading parallel grid axis.
    qf = q.reshape(B * H, Sq, D)
    kf = k.reshape(B * H, Sk, D)
    vf = v.reshape(B * H, Sk, D)

    tq = _choose_q_tile(Sq, Sk, D, has_mask)
    n_q = Sq // tq

    q_spec = pl.BlockSpec((1, tq, D), lambda bh, qi: (bh, qi, 0))
    kv_spec = pl.BlockSpec((1, Sk, D), lambda bh, qi: (bh, 0, 0))
    out_spec = pl.BlockSpec((1, tq, D), lambda bh, qi: (bh, qi, 0))
    attn_spec = pl.BlockSpec((1, tq, Sk), lambda bh, qi: (bh, qi, 0))

    in_specs = [q_spec, kv_spec, kv_spec]
    args = [qf, kf, vf]
    if has_mask:
        # Mask stays at its natural (possibly broadcast) batch/head shape;
        # broadcast axes are pinned to block 0 in the index_map -> no HBM blowup.
        Bm, Hm = mask.shape[0], mask.shape[1]

        def mask_map(bh, qi, _H=H, _Bm=Bm, _Hm=Hm):
            b = bh // _H if _Bm != 1 else 0
            h = bh % _H if _Hm != 1 else 0
            return (b, h, qi, 0)

        in_specs.append(pl.BlockSpec((1, 1, tq, Sk), mask_map))
        args.append(mask)

    kernel = functools.partial(
        _sdpa_kernel,
        scale=float(D) ** -0.5,
        matmul_dtype=matmul_dtype,
        has_mask=has_mask)

    # Advisory cost hint for XLA scheduling around the custom call.
    itemsize = 4
    bytes_accessed = itemsize * (
        qf.size + kf.size + vf.size + B * H * Sq * D + B * H * Sq * Sk
        + (mask.size if has_mask else 0))
    cost = pl.CostEstimate(
        flops=2 * B * H * Sq * Sk * D * 2,
        transcendentals=B * H * Sq * Sk,
        bytes_accessed=bytes_accessed)

    out, attn = pl.pallas_call(
        kernel,
        out_shape=(
            jax.ShapeDtypeStruct((B * H, Sq, D), q.dtype),        # attended values
            jax.ShapeDtypeStruct((B * H, Sq, Sk), jnp.float32),   # attn weights
        ),
        grid_spec=pltpu.PrefetchScalarGridSpec(
            num_scalar_prefetch=0,
            grid=(B * H, n_q),
            in_specs=in_specs,
            out_specs=[out_spec, attn_spec],
        ),
        compiler_params=pltpu.CompilerParams(
            dimension_semantics=("parallel", "parallel")),
        cost_estimate=cost,
    )(*args)

    return out.reshape(B, H, Sq, D), attn.reshape(B, H, Sq, Sk)


def scale_dot_product_attention(q, k, v, mask=None, matmul_dtype=jnp.float32):
    """Pallas equivalent of ScaleDotProductAttention.forward.

    q, k, v: [B, H, S, D].  mask: optional, broadcastable to [B, H, Sq, Sk].
    matmul_dtype=jnp.bfloat16 feeds the MXU bf16 (f32 accumulation) for speed.
    """
    q = jnp.asarray(q)
    k = jnp.asarray(k)
    v = jnp.asarray(v)
    Sq, Sk = q.shape[2], k.shape[2]
    if mask is None:
        return _sdpa_pallas(q, k, v, None, has_mask=False,
                            matmul_dtype=matmul_dtype)
    mask = jnp.asarray(mask, jnp.float32)
    # Pad to rank 4 and broadcast ONLY the (query, key) dims; batch/head
    # broadcast axes are handled by the BlockSpec index_map (no HBM copy).
    mask = mask.reshape((1,) * (4 - mask.ndim) + mask.shape)
    mask = jnp.broadcast_to(mask, mask.shape[:2] + (Sq, Sk))
    return _sdpa_pallas(q, k, v, mask, has_mask=True,
                        matmul_dtype=matmul_dtype)


def _reference(q, k, v, mask=None):
    d = k.shape[-1]
    score = jnp.einsum("bhqd,bhkd->bhqk", q, k) / jnp.sqrt(jnp.float32(d))
    if mask is not None:
        score = score + mask
    w = jax.nn.softmax(score, axis=-1)
    out = jnp.einsum("bhqk,bhkd->bhqd", w, v)
    return out, w


if __name__ == "__main__":
    key = jax.random.PRNGKey(0)
    kq, kk, kv = jax.random.split(key, 3)

    B, H, S, D = 2, 2, 8, 32
    q = jax.random.normal(kq, (B, H, S, D), dtype=jnp.float32)
    k = jax.random.normal(kk, (B, H, S, D), dtype=jnp.float32)
    v = jax.random.normal(kv, (B, H, S, D), dtype=jnp.float32)

    # causal additive mask kept at its natural (1, 1, S, S) shape — the kernel
    # does NOT broadcast it to (B, H, S, S) in HBM.
    causal = jnp.where(jnp.tril(jnp.ones((S, S), dtype=bool)), 0.0, -1e9)
    mask = causal.astype(jnp.float32)[None, None]

    ref_out_m, ref_attn_m = _reference(q, k, v, mask)
    ref_out_n, ref_attn_n = _reference(q, k, v)

    # f32 matmul path (matches the PyTorch module's numerics)
    out, attn = scale_dot_product_attention(q, k, v, mask)
    jax.block_until_ready((out, attn))
    assert jnp.allclose(out, ref_out_m, atol=2e-3, rtol=2e-3)
    assert jnp.allclose(attn, ref_attn_m, atol=2e-3, rtol=2e-3)

    # unmasked path
    out2, attn2 = scale_dot_product_attention(q, k, v)
    jax.block_until_ready((out2, attn2))
    assert jnp.allclose(out2, ref_out_n, atol=2e-3, rtol=2e-3)
    assert jnp.allclose(attn2, ref_attn_n, atol=2e-3, rtol=2e-3)

    # bf16-fed MXU path (f32 accumulation) — looser tolerance expected
    out3, attn3 = scale_dot_product_attention(q, k, v, mask,
                                              matmul_dtype=jnp.bfloat16)
    jax.block_until_ready((out3, attn3))
    assert jnp.allclose(out3, ref_out_m, atol=5e-2, rtol=5e-2)
    assert jnp.allclose(attn3, ref_attn_m, atol=5e-2, rtol=5e-2)

    print("KERNEL_OK")
</pallas_src>

<mosaic_0001>
module attributes {stable_mosaic.version = 11 : i64} {
  func.func @_sdpa_kernel(%arg0: i32, %arg1: i32, %arg2: memref<1x8x32xf32, #tpu.memory_space<vmem>>, %arg3: memref<1x8x32xf32, #tpu.memory_space<vmem>>, %arg4: memref<1x8x32xf32, #tpu.memory_space<vmem>>, %arg5: memref<1x1x8x8xf32, #tpu.memory_space<vmem>>, %arg6: memref<1x8x32xf32, #tpu.memory_space<vmem>>, %arg7: memref<1x8x8xf32, #tpu.memory_space<vmem>>) attributes {dimension_semantics = [#tpu.dimension_semantics<parallel>, #tpu.dimension_semantics<parallel>], iteration_bounds = array<i64: 4, 1>, scalar_prefetch = 0 : i64, scratch_operands = 0 : i64, tpu.core_type = #tpu.core_type<tc>, window_params = [{transform_indices = @transform_0, window_bounds = array<i64: 1, 8, 32>}, {transform_indices = @transform_1, window_bounds = array<i64: 1, 8, 32>}, {transform_indices = @transform_2, window_bounds = array<i64: 1, 8, 32>}, {transform_indices = @transform_3, window_bounds = array<i64: 1, 1, 8, 8>}, {transform_indices = @transform_4, window_bounds = array<i64: 1, 8, 32>}, {transform_indices = @transform_5, window_bounds = array<i64: 1, 8, 8>}]} {
    %c0 = arith.constant 0 : index
    %c0_0 = arith.constant 0 : index
    %c0_1 = arith.constant 0 : index
    %0 = vector.load %arg2[%c0, %c0_0, %c0_1] : memref<1x8x32xf32, #tpu.memory_space<vmem>>, vector<1x8x32xf32>
    %1 = vector.shape_cast %0 : vector<1x8x32xf32> to vector<8x32xf32>
    %cst = arith.constant 0.176776692 : f32
    %2 = vector.broadcast %cst : f32 to vector<8x32xf32>
    %3 = arith.mulf %1, %2 : vector<8x32xf32>
    %c0_2 = arith.constant 0 : index
    %c0_3 = arith.constant 0 : index
    %c0_4 = arith.constant 0 : index
    %4 = vector.load %arg3[%c0_2, %c0_3, %c0_4] : memref<1x8x32xf32, #tpu.memory_space<vmem>>, vector<1x8x32xf32>
    %5 = vector.shape_cast %4 : vector<1x8x32xf32> to vector<8x32xf32>
    %c0_5 = arith.constant 0 : index
    %c0_6 = arith.constant 0 : index
    %c0_7 = arith.constant 0 : index
    %6 = vector.load %arg4[%c0_5, %c0_6, %c0_7] : memref<1x8x32xf32, #tpu.memory_space<vmem>>, vector<1x8x32xf32>
    %7 = vector.shape_cast %6 : vector<1x8x32xf32> to vector<8x32xf32>
    %cst_8 = arith.constant dense<0.000000e+00> : vector<8x8xf32>
    %8 = tpu.matmul %3, %5, %cst_8 {dimension_numbers = #tpu.dot_dimension_numbers<[1], [1], [0], [0], [0, 0, 1, 0], [], []>} : vector<8x32xf32>, vector<8x32xf32>, vector<8x8xf32> -> vector<8x8xf32>
    %c0_9 = arith.constant 0 : index
    %c0_10 = arith.constant 0 : index
    %c0_11 = arith.constant 0 : index
    %c0_12 = arith.constant 0 : index
    %9 = vector.load %arg5[%c0_9, %c0_10, %c0_11, %c0_12] : memref<1x1x8x8xf32, #tpu.memory_space<vmem>>, vector<1x1x8x8xf32>
    %10 = vector.shape_cast %9 : vector<1x1x8x8xf32> to vector<8x8xf32>
    %11 = arith.addf %8, %10 : vector<8x8xf32>
    %cst_13 = arith.constant dense<0xFF800000> : vector<8xf32>
    %12 = vector.multi_reduction <maximumf>, %11, %cst_13 [1] : vector<8x8xf32> to vector<8xf32>
    %13 = vector.shape_cast %12 : vector<8xf32> to vector<8x1xf32>
    %14 = vector.broadcast %13 : vector<8x1xf32> to vector<8x8xf32>
    %15 = arith.subf %11, %14 : vector<8x8xf32>
    %16 = math.exp %15 : vector<8x8xf32>
    %cst_14 = arith.constant dense<0.000000e+00> : vector<8xf32>
    %17 = vector.multi_reduction <add>, %16, %cst_14 [1] : vector<8x8xf32> to vector<8xf32>
    %18 = vector.shape_cast %17 : vector<8xf32> to vector<8x1xf32>
    %19 = tpu.reciprocal %18 {approx = true} : vector<8x1xf32> -> vector<8x1xf32>
    %20 = vector.broadcast %19 : vector<8x1xf32> to vector<8x8xf32>
    %21 = arith.mulf %16, %20 : vector<8x8xf32>
    %c0_15 = arith.constant 0 : index
    %c0_16 = arith.constant 0 : index
    %c0_17 = arith.constant 0 : index
    %22 = vector.load %arg7[%c0_15, %c0_16, %c0_17] : memref<1x8x8xf32, #tpu.memory_space<vmem>>, vector<1x8x8xf32>
    %23 = vector.shape_cast %22 : vector<1x8x8xf32> to vector<8x8xf32>
    %24 = vector.shape_cast %21 : vector<8x8xf32> to vector<1x8x8xf32>
    tpu.vector_store %arg7[%c0_15, %c0_16, %c0_17], %24 {strides = array<i32>} : memref<1x8x8xf32, #tpu.memory_space<vmem>>, vector<1x8x8xf32>,
    %cst_18 = arith.constant dense<0.000000e+00> : vector<8x32xf32>
    %25 = tpu.matmul %21, %7, %cst_18 {dimension_numbers = #tpu.dot_dimension_numbers<[1], [0], [0], [1], [0, 0, 1, 1], [], []>} : vector<8x8xf32>, vector<8x32xf32>, vector<8x32xf32> -> vector<8x32xf32>
    %c0_19 = arith.constant 0 : index
    %c0_20 = arith.constant 0 : index
    %c0_21 = arith.constant 0 : index
    %26 = vector.load %arg6[%c0_19, %c0_20, %c0_21] : memref<1x8x32xf32, #tpu.memory_space<vmem>>, vector<1x8x32xf32>
    %27 = vector.shape_cast %26 : vector<1x8x32xf32> to vector<8x32xf32>
    %28 = vector.shape_cast %25 : vector<8x32xf32> to vector<1x8x32xf32>
    tpu.vector_store %arg6[%c0_19, %c0_20, %c0_21], %28 {strides = array<i32>} : memref<1x8x32xf32, #tpu.memory_space<vmem>>, vector<1x8x32xf32>,
    return
  }
  func.func @transform_0(%arg0: i32, %arg1: i32) -> (i32, i32, i32) {
    %c0_i32 = arith.constant 0 : i32
    %c0_i32_0 = arith.constant 0 : i32
    return %arg0, %arg1, %c0_i32 : i32, i32, i32
  }
  func.func @transform_1(%arg0: i32, %arg1: i32) -> (i32, i32, i32) {
    %c0_i32 = arith.constant 0 : i32
    %c0_i32_0 = arith.constant 0 : i32
    %c0_i32_1 = arith.constant 0 : i32
    return %arg0, %c0_i32, %c0_i32_0 : i32, i32, i32
  }
  func.func @transform_2(%arg0: i32, %arg1: i32) -> (i32, i32, i32) {
    %c0_i32 = arith.constant 0 : i32
    %c0_i32_0 = arith.constant 0 : i32
    %c0_i32_1 = arith.constant 0 : i32
    return %arg0, %c0_i32, %c0_i32_0 : i32, i32, i32
  }
  func.func @transform_3(%arg0: i32, %arg1: i32) -> (i32, i32, i32, i32) {
    %c0_i32 = arith.constant 0 : i32
    %c0_i32_0 = arith.constant 0 : i32
    %c0_i32_1 = arith.constant 0 : i32
    %c0_i32_2 = arith.constant 0 : i32
    return %c0_i32, %c0_i32_0, %arg1, %c0_i32_1 : i32, i32, i32, i32
  }
  func.func @transform_4(%arg0: i32, %arg1: i32) -> (i32, i32, i32) {
    %c0_i32 = arith.constant 0 : i32
    %c0_i32_0 = arith.constant 0 : i32
    return %arg0, %arg1, %c0_i32 : i32, i32, i32
  }
  func.func @transform_5(%arg0: i32, %arg1: i32) -> (i32, i32, i32) {
    %c0_i32 = arith.constant 0 : i32
    %c0_i32_0 = arith.constant 0 : i32
    return %arg0, %arg1, %c0_i32 : i32, i32, i32
  }
}

</mosaic_0001>

<llo_original>
// kernel: _sdpa_pallas.1
$region0: #{_sdpa_pallas.1}
  #allocation0 [shape = 'u32[]', space=smem, size = 0x4, offset = 0x4, fixed_abs, tag = 'smem constant byte address 0x4 - core index']
  #allocation1 [shape = 'u32[144,128]{1,0:T(1,128)}', space=vmem, size = 0x12000, scoped, tag = 'internal scratch']
  %s0 = inlined_call_operand.hbm [shape: f32[4,8,32], index: 0, kind: input, shape index: {}]
  %s1 = inlined_call_operand.hbm [shape: f32[4,8,32], index: 1, kind: input, shape index: {}]
  %s2 = inlined_call_operand.hbm [shape: f32[4,8,32], index: 2, kind: input, shape index: {}]
  %s3 = inlined_call_operand.vmem [shape: f32[1,1,8,8], index: 3, kind: input, shape index: {}]
  %s4 = inlined_call_operand.hbm [shape: f32[4,8,32], index: 4, kind: output, shape index: {0}]
  %s5 = inlined_call_operand.hbm [shape: f32[4,8,8], index: 5, kind: output, shape index: {1}]
  %6 = xla_tuple %s4, %s5
  %s7 = sld [smem:[#allocation0]]
  $region69: #{_sdpa_pallas.1} parent=0
    _
  %s9 = ssub.s32 1, %s7
  %s10 = scalar_select 0, %s9, %s7
  $region1: #{_sdpa_pallas.1} parent=0
    #allocation2 [shape = 'u8[8192]{0}', space=vmem, size = 0x2000, scoped, tag = 'input window, operand 0']
    #allocation3 [shape = 's32[2]{0}', space=sflag, size = 0x8, scoped, tag = 'scoped memory for _sdpa_pallas.1']
    #allocation4 [shape = 's32[2]{0}', space=sflag, size = 0x8, scoped, tag = 'scoped memory for _sdpa_pallas.1']
    #allocation5 [shape = 'u8[8192]{0}', space=vmem, size = 0x2000, scoped, tag = 'input window, operand 1']
    #allocation6 [shape = 's32[2]{0}', space=sflag, size = 0x8, scoped, tag = 'scoped memory for _sdpa_pallas.1']
    #allocation7 [shape = 'u8[8192]{0}', space=vmem, size = 0x2000, scoped, tag = 'input window, operand 2']
    #allocation8 [shape = 'u8[8192]{0}', space=vmem, size = 0x2000, scoped, tag = 'output window, operand 0']
    #allocation9 [shape = 'u8[8192]{0}', space=vmem, size = 0x2000, scoped, tag = 'output window, operand 1']
    #allocation10 [shape = 's32[2]{0}', space=sflag, size = 0x8, scoped, tag = 'scoped memory for _sdpa_pallas.1']
    %11 = vsyncpa [#allocation3], 0
    %s12 = scalar_lea.sflag [#allocation3], 1
    %13 = vsyncpa %s12, 0
    %14 = vsyncpa [#allocation6], 0
    %s15 = scalar_lea.sflag [#allocation6], 1
    %16 = vsyncpa %s15, 0
    %17 = vsyncpa [#allocation4], 0
    %s18 = scalar_lea.sflag [#allocation4], 1
    %19 = vsyncpa %s18, 0
    %20 = vsyncpa [#allocation10], 0
    %s21 = scalar_lea.sflag [#allocation10], 1
    %22 = vsyncpa %s21, 0
    loop: start=0, step=1, limit=6
    $region2: #{_sdpa_pallas.1} parent=1 // loop_pre_header
      _
    $region3: #{_sdpa_pallas.1} parent=1 // loop_header
      %s24 = sphi 0, %s28
      %p25 = scmp.ge.s32.totalorder %s24, 6
      %s31 = sphi 0, %s43
      %s32 = sphi 0, %s39
      %s33 = sphi 0, %s31
      %s34 = sphi 0, %s32
      %s35 = sphi 0, %s33
      %s36 = sphi 0, %s34
      %s48 = sphi 0, %s50
      %s51 = sphi 0, %s48
      %s52 = sphi 0, %s51
      %s68 = sphi 0, %s52
      %s74 = sphi 0, %s76
      %s77 = sphi 0, %s74
      %s78 = sphi 0, %s77
      %s94 = sphi 0, %s78
      %s100 = sphi 0, %s102
      %s103 = sphi 0, %s100
      %s104 = sphi 0, %s103
      %s120 = sphi 0, %s104
      %s126 = sphi 0, %s128
      %s129 = sphi 0, %s126
      %s130 = sphi 0, %s129
      %s146 = sphi 0, %s130
      %s154 = sphi 0, %s156
      %s157 = sphi 0, %s154
      %s158 = sphi 0, %s157
      %s174 = sphi 0, %s158
      %s182 = sphi 0, %s184
      %s185 = sphi 0, %s182
      %s186 = sphi 0, %s185
      %s202 = sphi 0, %s186
    $region4: #{_sdpa_pallas.1} parent=1 // loop_header_branch
      %27 = sbr.rel (%p25) target = $region8
    $region5: #{_sdpa_pallas.1} parent=1 // loop_body
      %s29 = ssub.s32 %s24, 1
      %s30 = ssub.s32 %s24, 2
      %s37 = sadd.s32 1, %s32
      %p38 = scmp.ge.s32.totalorder %s37, 1
      %s39 = scalar_select %p38, 0, %s37
      %s40 = sadd.s32 1, %s31
      %s41 = scalar_select %p38, %s40, %s31
      %p42 = scmp.ge.s32.totalorder %s41, 4
      %s43 = scalar_select %p42, 0, %s41
      %s44 = ssub.s32 %s31, %s43
      %s45 = ssub.s32 %s32, %s39
      %s46 = sor.u32 %s44, %s45
      %p47 = scmp.eq.s32.totalorder %s46, 0
      %s49 = sadd.s32 %s48, 1
      %s50 = scalar_select %p47, %s48, %s49
      %p53 = pneg %p47
      %p54 = scmp.eq.s32.totalorder %s24, 3
      %p55 = por %p53, %p54
      %p56 = scmp.ne.s32.totalorder %s48, %s51
      %p57 = scmp.eq.s32.totalorder %s24, 0
      %p58 = por %p56, %p57
      %p59 = scmp.ne.s32.totalorder %s48, %s51
      %p60 = scmp.eq.s32.totalorder %s29, 3
      %p61 = por %p59, %p60
      %p62 = scmp.ne.s32.totalorder %s51, %s52
      %p63 = scmp.eq.s32.totalorder %s29, 0
      %p64 = por %p62, %p63
      %p65 = scmp.ne.s32.totalorder %s51, %s52
      %p66 = scmp.eq.s32.totalorder %s30, 3
      %p67 = por %p65, %p66
      %p69 = scmp.ne.s32.totalorder %s52, %s68
      %p70 = scmp.eq.s32.totalorder %s30, 0
      %p71 = por %p69, %p70
      %s72 = ssub.s32 %s31, %s43
      %p73 = scmp.eq.s32.totalorder %s72, 0
      %s75 = sadd.s32 %s74, 1
      %s76 = scalar_select %p73, %s74, %s75
      %p79 = pneg %p73
      %p80 = scmp.eq.s32.totalorder %s24, 3
      %p81 = por %p79, %p80
      %p82 = scmp.ne.s32.totalorder %s74, %s77
      %p83 = scmp.eq.s32.totalorder %s24, 0
      %p84 = por %p82, %p83
      %p85 = scmp.ne.s32.totalorder %s74, %s77
      %p86 = scmp.eq.s32.totalorder %s29, 3
      %p87 = por %p85, %p86
      %p88 = scmp.ne.s32.totalorder %s77, %s78
      %p89 = scmp.eq.s32.totalorder %s29, 0
      %p90 = por %p88, %p89
      %p91 = scmp.ne.s32.totalorder %s77, %s78
      %p92 = scmp.eq.s32.totalorder %s30, 3
      %p93 = por %p91, %p92
      %p95 = scmp.ne.s32.totalorder %s78, %s94
      %p96 = scmp.eq.s32.totalorder %s30, 0
      %p97 = por %p95, %p96
      %s98 = ssub.s32 %s31, %s43
      %p99 = scmp.eq.s32.totalorder %s98, 0
      %s101 = sadd.s32 %s100, 1
      %s102 = scalar_select %p99, %s100, %s101
      %p105 = pneg %p99
      %p106 = scmp.eq.s32.totalorder %s24, 3
      %p107 = por %p105, %p106
      %p108 = scmp.ne.s32.totalorder %s100, %s103
      %p109 = scmp.eq.s32.totalorder %s24, 0
      %p110 = por %p108, %p109
      %p111 = scmp.ne.s32.totalorder %s100, %s103
      %p112 = scmp.eq.s32.totalorder %s29, 3
      %p113 = por %p111, %p112
      %p114 = scmp.ne.s32.totalorder %s103, %s104
      %p115 = scmp.eq.s32.totalorder %s29, 0
      %p116 = por %p114, %p115
      %p117 = scmp.ne.s32.totalorder %s103, %s104
      %p118 = scmp.eq.s32.totalorder %s30, 3
      %p119 = por %p117, %p118
      %p121 = scmp.ne.s32.totalorder %s104, %s120
      %p122 = scmp.eq.s32.totalorder %s30, 0
      %p123 = por %p121, %p122
      %s124 = ssub.s32 %s32, %s39
      %p125 = scmp.eq.s32.totalorder %s124, 0
      %s127 = sadd.s32 %s126, 1
      %s128 = scalar_select %p125, %s126, %s127
      %p131 = pneg %p125
      %p132 = scmp.eq.s32.totalorder %s24, 3
      %p133 = por %p131, %p132
      %p134 = scmp.ne.s32.totalorder %s126, %s129
      %p135 = scmp.eq.s32.totalorder %s24, 0
      %p136 = por %p134, %p135
      %p137 = scmp.ne.s32.totalorder %s126, %s129
      %p138 = scmp.eq.s32.totalorder %s29, 3
      %p139 = por %p137, %p138
      %p140 = scmp.ne.s32.totalorder %s129, %s130
      %p141 = scmp.eq.s32.totalorder %s29, 0
      %p142 = por %p140, %p141
      %p143 = scmp.ne.s32.totalorder %s129, %s130
      %p144 = scmp.eq.s32.totalorder %s30, 3
      %p145 = por %p143, %p144
      %p147 = scmp.ne.s32.totalorder %s130, %s146
      %p148 = scmp.eq.s32.totalorder %s30, 0
      %p149 = por %p147, %p148
      %s150 = ssub.s32 %s31, %s43
      %s151 = ssub.s32 %s32, %s39
      %s152 = sor.u32 %s150, %s151
      %p153 = scmp.eq.s32.totalorder %s152, 0
      %s155 = sadd.s32 %s154, 1
      %s156 = scalar_select %p153, %s154, %s155
      %p159 = pneg %p153
      %p160 = scmp.eq.s32.totalorder %s24, 3
      %p161 = por %p159, %p160
      %p162 = scmp.ne.s32.totalorder %s154, %s157
      %p163 = scmp.eq.s32.totalorder %s24, 0
      %p164 = por %p162, %p163
      %p165 = scmp.ne.s32.totalorder %s154, %s157
      %p166 = scmp.eq.s32.totalorder %s29, 3
      %p167 = por %p165, %p166
      %p168 = scmp.ne.s32.totalorder %s157, %s158
      %p169 = scmp.eq.s32.totalorder %s29, 0
      %p170 = por %p168, %p169
      %p171 = scmp.ne.s32.totalorder %s157, %s158
      %p172 = scmp.eq.s32.totalorder %s30, 3
      %p173 = por %p171, %p172
      %p175 = scmp.ne.s32.totalorder %s158, %s174
      %p176 = scmp.eq.s32.totalorder %s30, 0
      %p177 = por %p175, %p176
      %s178 = ssub.s32 %s31, %s43
      %s179 = ssub.s32 %s32, %s39
      %s180 = sor.u32 %s178, %s179
      %p181 = scmp.eq.s32.totalorder %s180, 0
      %s183 = sadd.s32 %s182, 1
      %s184 = scalar_select %p181, %s182, %s183
      %p187 = pneg %p181
      %p188 = scmp.eq.s32.totalorder %s24, 3
      %p189 = por %p187, %p188
      %p190 = scmp.ne.s32.totalorder %s182, %s185
      %p191 = scmp.eq.s32.totalorder %s24, 0
      %p192 = por %p190, %p191
      %p193 = scmp.ne.s32.totalorder %s182, %s185
      %p194 = scmp.eq.s32.totalorder %s29, 3
      %p195 = por %p193, %p194
      %p196 = scmp.ne.s32.totalorder %s185, %s186
      %p197 = scmp.eq.s32.totalorder %s29, 0
      %p198 = por %p196, %p197
      %p199 = scmp.ne.s32.totalorder %s185, %s186
      %p200 = scmp.eq.s32.totalorder %s30, 3
      %p201 = por %p199, %p200
      %p203 = scmp.ne.s32.totalorder %s186, %s202
      %p204 = scmp.eq.s32.totalorder %s30, 0
      %p205 = por %p203, %p204
      %p206 = scmp.le.s32.totalorder 1, %s24
      %p207 = scmp.lt.s32.totalorder %s24, 5
      %p208 = pnand %p206, %p207
      %p209 = pneg %p208
      // Predicated region
      $region9: #{_sdpa_pallas.1} parent=5 // pred_check
        _
      $region10: #{_sdpa_pallas.1} parent=5 // pred_check_branch
        %211 = sbr.rel (%p208) target = $region12
      $region11: #{_sdpa_pallas.1} parent=5 // pred_region
        %s212 = ssub.s32 %s24, 1
        // Predicated region
        $region13: #{_sdpa_pallas.1} parent=11 // pred_check
          %p213 = pneg %p142
        $region14: #{_sdpa_pallas.1} parent=11 // pred_check_branch
          %215 = sbr.rel (%p213) target = $region16
        $region15: #{_sdpa_pallas.1} parent=11 // pred_region
          %p216 = scmp.lt.s32.totalorder %s34, 0
          %s217 = scalar_select %p216, %s34, 0
          %s218 = smul.addr %s217, 8
          %s219 = scalar_lea.vmem %s3, %s218
        $region16: #{_sdpa_pallas.1} parent=11 // pred_fallthru
          _
      $region12: #{_sdpa_pallas.1} parent=5 // pred_fallthru
        _
      %p220 = scmp.lt.s32.totalorder %s24, 4
      // Predicated region
      $region17: #{_sdpa_pallas.1} parent=5 // pred_check
        %p221 = pneg %p220
      $region18: #{_sdpa_pallas.1} parent=5 // pred_check_branch
        %223 = sbr.rel (%p221) target = $region20
      $region19: #{_sdpa_pallas.1} parent=5 // pred_region
        // Predicated region
        $region21: #{_sdpa_pallas.1} parent=19 // pred_check
          %p224 = pneg %p58
        $region22: #{_sdpa_pallas.1} parent=19 // pred_check_branch
          %226 = sbr.rel (%p224) target = $region24
        $region23: #{_sdpa_pallas.1} parent=19 // pred_region
          %s227 = sand.u32 %s48, 1
          %s228 = scalar_lea.sflag [#allocation3], %s227
          %s229 = sand.u32 %s48, 1
          %s230 = smul.addr %s229, 8
          %s231 = scalar_lea.vmem [#allocation2], %s230
          %s233 = ssub.s32 128, 128
          %234 = vsyncadd %s228, %s233
          %s235 = sadd.s32 %s32, %s31
          %s236 = smul.addr %s235, 128
          %s237 = scalar_lea.hbm %s0, %s236
          %s239 = sshll.u32 %s231, 4
          %s240 = int_to_ptr.vmem [resolvable:$true] %s239
          %242 = dma.hbm_to_vmem [thread:$0]  %s237, 128, %s240, %s228
        $region24: #{_sdpa_pallas.1} parent=19 // pred_fallthru
          _
        // Predicated region
        $region25: #{_sdpa_pallas.1} parent=19 // pred_check
          %p243 = pneg %p84
        $region26: #{_sdpa_pallas.1} parent=19 // pred_check_branch
          %245 = sbr.rel (%p243) target = $region28
        $region27: #{_sdpa_pallas.1} parent=19 // pred_region
          %s246 = sand.u32 %s24, 1
          %s247 = scalar_lea.sflag [#allocation6], %s246
          %s248 = sand.u32 %s74, 1
          %s249 = smul.addr %s248, 8
          %s250 = scalar_lea.vmem [#allocation5], %s249
          %s252 = ssub.s32 128, 128
          %253 = vsyncadd %s247, %s252
          %s254 = smul.addr %s31, 128
          %s255 = scalar_lea.hbm %s1, %s254
          %s257 = sshll.u32 %s250, 4
          %s258 = int_to_ptr.vmem [resolvable:$true] %s257
          %260 = dma.hbm_to_vmem [thread:$0]  %s255, 128, %s258, %s247
        $region28: #{_sdpa_pallas.1} parent=19 // pred_fallthru
          _
        // Predicated region
        $region29: #{_sdpa_pallas.1} parent=19 // pred_check
          %p261 = pneg %p110
        $region30: #{_sdpa_pallas.1} parent=19 // pred_check_branch
          %263 = sbr.rel (%p261) target = $region32
        $region31: #{_sdpa_pallas.1} parent=19 // pred_region
          %s264 = sand.u32 %s24, 1
          %s265 = scalar_lea.sflag [#allocation6], %s264
          %s266 = sand.u32 %s100, 1
          %s267 = smul.addr %s266, 8
          %s268 = scalar_lea.vmem [#allocation7], %s267
          %s270 = ssub.s32 128, 128
          %271 = vsyncadd %s265, %s270
          %s272 = smul.addr %s31, 128
          %s273 = scalar_lea.hbm %s2, %s272
          %s275 = sshll.u32 %s268, 4
          %s276 = int_to_ptr.vmem [resolvable:$true] %s275
          %278 = dma.hbm_to_vmem [thread:$0]  %s273, 128, %s276, %s265
        $region32: #{_sdpa_pallas.1} parent=19 // pred_fallthru
          _
      $region20: #{_sdpa_pallas.1} parent=5 // pred_fallthru
        _
      %p279 = scmp.le.s32.totalorder 1, %s24
      %p280 = scmp.lt.s32.totalorder %s24, 5
      %p281 = pnand %p279, %p280
      %p282 = pneg %p281
      // Predicated region
      $region33: #{_sdpa_pallas.1} parent=5 // pred_check
        _
      $region34: #{_sdpa_pallas.1} parent=5 // pred_check_branch
        %284 = sbr.rel (%p281) target = $region36
      $region35: #{_sdpa_pallas.1} parent=5 // pred_region
        %s285 = ssub.s32 %s24, 1
        %s286 = sand.u32 %s51, 1
        %s287 = scalar_lea.sflag [#allocation3], %s286
        %s288 = sand.u32 %s51, 1
        %s289 = smul.addr %s288, 8
        %s290 = scalar_lea.vmem [#allocation2], %s289
        // Predicated region
        $region37: #{_sdpa_pallas.1} parent=35 // pred_check
          %p291 = pneg %p64
        $region38: #{_sdpa_pallas.1} parent=35 // pred_check_branch
          %293 = sbr.rel (%p291) target = $region40
        $region39: #{_sdpa_pallas.1} parent=35 // pred_region
          %294 = dma.done %s287, 128
        $region40: #{_sdpa_pallas.1} parent=35 // pred_fallthru
          _
        %s295 = sand.u32 %s29, 1
        %s296 = scalar_lea.sflag [#allocation6], %s295
        %s297 = sand.u32 %s77, 1
        %s298 = smul.addr %s297, 8
        %s299 = scalar_lea.vmem [#allocation5], %s298
        // Predicated region
        $region41: #{_sdpa_pallas.1} parent=35 // pred_check
          %p300 = pneg %p90
        $region42: #{_sdpa_pallas.1} parent=35 // pred_check_branch
          %302 = sbr.rel (%p300) target = $region44
        $region43: #{_sdpa_pallas.1} parent=35 // pred_region
          %303 = dma.done %s296, 128
        $region44: #{_sdpa_pallas.1} parent=35 // pred_fallthru
          _
        %s304 = sand.u32 %s29, 1
        %s305 = scalar_lea.sflag [#allocation6], %s304
        %s306 = sand.u32 %s103, 1
        %s307 = smul.addr %s306, 8
        %s308 = scalar_lea.vmem [#allocation7], %s307
        // Predicated region
        $region45: #{_sdpa_pallas.1} parent=35 // pred_check
          %p309 = pneg %p116
        $region46: #{_sdpa_pallas.1} parent=35 // pred_check_branch
          %311 = sbr.rel (%p309) target = $region48
        $region47: #{_sdpa_pallas.1} parent=35 // pred_region
          %312 = dma.done %s305, 128
        $region48: #{_sdpa_pallas.1} parent=35 // pred_fallthru
          _
        %s313 = sand.u32 %s51, 1
        %s314 = scalar_lea.sflag [#allocation3], %s313
        %s315 = sand.u32 %s51, 1
        %s316 = smul.addr %s315, 8
        %s317 = scalar_lea.vmem [#allocation2], %s316
        %p318 = pneg %p64
        %p319 = pneg %p61
        %s320 = sand.u32 %s29, 1
        %s321 = scalar_lea.sflag [#allocation6], %s320
        %s322 = sand.u32 %s77, 1
        %s323 = smul.addr %s322, 8
        %s324 = scalar_lea.vmem [#allocation5], %s323
        %p325 = pneg %p90
        %p326 = pneg %p87
        %s327 = sand.u32 %s29, 1
        %s328 = scalar_lea.sflag [#allocation6], %s327
        %s329 = sand.u32 %s103, 1
        %s330 = smul.addr %s329, 8
        %s331 = scalar_lea.vmem [#allocation7], %s330
        %p332 = pneg %p116
        %p333 = pneg %p113
        %p334 = scmp.lt.s32.totalorder %s34, 0
        %s335 = scalar_select %p334, %s34, 0
        %s336 = smul.addr %s335, 8
        %s337 = scalar_lea.vmem %s3, %s336
        %p338 = pneg %p142
        %p339 = pneg %p139
        %p340 = pneg %p170
        %p341 = pneg %p167
        %s342 = sand.u32 %s157, 1
        %s343 = scalar_lea.sflag [#allocation4], %s342
        %s344 = sand.u32 %s157, 1
        %s345 = smul.addr %s344, 8
        %s346 = scalar_lea.vmem [#allocation8], %s345
        %p347 = pneg %p198
        %p348 = pneg %p195
        %s349 = sand.u32 %s185, 1
        %s350 = scalar_lea.sflag [#allocation10], %s349
        %s351 = sand.u32 %s185, 1
        %s352 = smul.addr %s351, 8
        %s353 = scalar_lea.vmem [#allocation9], %s352
        %p354 = scmp.lt.s32.totalorder %s34, 0
        %s355 = scalar_select %p354, %s34, 0
        %s356 = smul.addr %s355, 8
        %s357 = scalar_lea.vmem %s3, %s356
        %v358 = vld [vmem:[%s290] sm:$0xff]
        %v359 = vmul.f32 %v358, 0.17677669
        %v360 = vld [vmem:[%s299] sm:$0xff]
        %v361 = vld [vmem:[%s308] sm:$0xff]
        %v362 = vld [vmem:[%s357] sm:$0xff]
        %vm363 = vcmask 261120
        %v365 = vsel %vm363, %v359, 0
        %v368 = vsel %vm363, %v360, 0
        %370 = vmatprep.subr.mxu0 0.0
        %371 = vmatpush1.xpose.msra.mxu0 %v368
        %372 = vmatprep.subr.mxu0 0.0
        %373 = vmatpush1.xpose.msra.mxu0 0.0
        %374 = vmatprep.subr.mxu0 0.0
        %375 = vmatpush1.xpose.msra.mxu0 0.0
        %376 = vmatprep.subr.mxu0 0.0
        %377 = vmatpush1.xpose.msra.mxu0 0.0
        %378 = vmatprep.subr.mxu0 0.0
        %379 = vmatpush1.xpose.msra.mxu0 0.0
        %380 = vmatprep.subr.mxu0 0.0
        %381 = vmatpush1.xpose.msra.mxu0 0.0
        %382 = vmatprep.subr.mxu0 0.0
        %383 = vmatpush1.xpose.msra.mxu0 0.0
        %384 = vmatprep.subr.mxu0 0.0
        %385 = vmatpush1.xpose.msra.mxu0 0.0
        %386 = vmatprep.subr.mxu0 0.0
        %387 = vmatpush1.xpose.msra.mxu0 0.0
        %388 = vmatprep.subr.mxu0 0.0
        %389 = vmatpush1.xpose.msra.mxu0 0.0
        %390 = vmatprep.subr.mxu0 0.0
        %391 = vmatpush1.xpose.msra.mxu0 0.0
        %392 = vmatprep.subr.mxu0 0.0
        %393 = vmatpush1.xpose.msra.mxu0 0.0
        %394 = vmatprep.subr.mxu0 0.0
        %395 = vmatpush1.xpose.msra.mxu0 0.0
        %396 = vmatprep.subr.mxu0 0.0
        %397 = vmatpush1.xpose.msra.mxu0 0.0
        %398 = vmatprep.subr.mxu0 0.0
        %399 = vmatpush1.xpose.msra.mxu0 0.0
        %400 = vmatprep.subr.mxu0 0.0
        %401 = vmatpush1.xpose.msra.mxu0 0.0
        %402 = vmatprep.subr.mxu0 0.0
        %403 = vmatpush1.xpose.msra.mxu0 0.0
        %404 = vmatprep.subr.mxu0 0.0
        %405 = vmatpush1.xpose.msra.mxu0 0.0
        %406 = vmatprep.subr.mxu0 0.0
        %407 = vmatpush1.xpose.msra.mxu0 0.0
        %408 = vmatprep.subr.mxu0 0.0
        %409 = vmatpush1.xpose.msra.mxu0 0.0
        %410 = vmatprep.subr.mxu0 0.0
        %411 = vmatpush1.xpose.msra.mxu0 0.0
        %412 = vmatprep.subr.mxu0 0.0
        %413 = vmatpush1.xpose.msra.mxu0 0.0
        %414 = vmatprep.subr.mxu0 0.0
        %415 = vmatpush1.xpose.msra.mxu0 0.0
        %416 = vmatprep.subr.mxu0 0.0
        %417 = vmatpush1.xpose.msra.mxu0 0.0
        %418 = vmatprep.subr.mxu0 0.0
        %419 = vmatpush1.xpose.msra.mxu0 0.0
        %420 = vmatprep.subr.mxu0 0.0
        %421 = vmatpush1.xpose.msra.mxu0 0.0
        %422 = vmatprep.subr.mxu0 0.0
        %423 = vmatpush1.xpose.msra.mxu0 0.0
        %424 = vmatprep.subr.mxu0 0.0
        %425 = vmatpush1.xpose.msra.mxu0 0.0
        %426 = vmatprep.subr.mxu0 0.0
        %427 = vmatpush1.xpose.msra.mxu0 0.0
        %428 = vmatprep.subr.mxu0 0.0
        %429 = vmatpush1.xpose.msra.mxu0 0.0
        %430 = vmatprep.subr.mxu0 0.0
        %431 = vmatpush1.xpose.msra.mxu0 0.0
        %432 = vmatprep.subr.mxu0 0.0
        %433 = vmatpush1.xpose.msra.mxu0 0.0
        %434 = vmatprep.mubr.f32.mxu0 0.0
        %435 = vmatmul.mubr.f32.gmra.mrb[0].mxu0 %v365
        %v436 = vpop.f32.mrb[0].mxu0
        %v437 = vadd.f32 %v362, %v436
        %v438 = vpop.f32.mrb[0].mxu0
        %439 = vdwg.mxu0
        %vm440 = vcmask 64512
        %v441 = vsel %vm440, %v437, -inf
        %442 = vmax.xlane.f32.xlu0 %v441
        %v443 = vpop.xlane.xlu0 %442
        %v444 = vsub.f32 %v437, %v443
        %v445 = vmul.f32 %v444, 1.442695
        %v446 = vpow.pop %v445
        %v447 = vsel %vm440, %v446, 0.0
        %448 = vadd.xlane.f32.xlu0 %v447
        %v449 = vpop.xlane.xlu0 %448
        %v450 = vrcp.pop %v449
        %v451 = vmul.f32 %v446, %v450
        %452 = vst.msk [vmem:[%s353] sm:$0xff] %vm440, %v451
        %v454 = vsel %vm440, %v451, 0
        %456 = vmatprep.subr.mxu0 0.0
        %457 = vmatpush1.msra.mxu0 %v361
        %458 = vmatprep.subr.mxu0 0.0
        %459 = vmatpush1.msra.mxu0 0.0
        %460 = vmatprep.subr.mxu0 0.0
        %461 = vmatpush1.msra.mxu0 0.0
        %462 = vmatprep.subr.mxu0 0.0
        %463 = vmatpush1.msra.mxu0 0.0
        %464 = vmatprep.subr.mxu0 0.0
        %465 = vmatpush1.msra.mxu0 0.0
        %466 = vmatprep.subr.mxu0 0.0
        %467 = vmatpush1.msra.mxu0 0.0
        %468 = vmatprep.subr.mxu0 0.0
        %469 = vmatpush1.msra.mxu0 0.0
        %470 = vmatprep.subr.mxu0 0.0
        %471 = vmatpush1.msra.mxu0 0.0
        %472 = vmatprep.subr.mxu0 0.0
        %473 = vmatpush1.msra.mxu0 0.0
        %474 = vmatprep.subr.mxu0 0.0
        %475 = vmatpush1.msra.mxu0 0.0
        %476 = vmatprep.subr.mxu0 0.0
        %477 = vmatpush1.msra.mxu0 0.0
        %478 = vmatprep.subr.mxu0 0.0
        %479 = vmatpush1.msra.mxu0 0.0
        %480 = vmatprep.subr.mxu0 0.0
        %481 = vmatpush1.msra.mxu0 0.0
        %482 = vmatprep.subr.mxu0 0.0
        %483 = vmatpush1.msra.mxu0 0.0
        %484 = vmatprep.subr.mxu0 0.0
        %485 = vmatpush1.msra.mxu0 0.0
        %486 = vmatprep.subr.mxu0 0.0
        %487 = vmatpush1.msra.mxu0 0.0
        %488 = vmatprep.subr.mxu0 0.0
        %489 = vmatpush1.msra.mxu0 0.0
        %490 = vmatprep.subr.mxu0 0.0
        %491 = vmatpush1.msra.mxu0 0.0
        %492 = vmatprep.subr.mxu0 0.0
        %493 = vmatpush1.msra.mxu0 0.0
        %494 = vmatprep.subr.mxu0 0.0
        %495 = vmatpush1.msra.mxu0 0.0
        %496 = vmatprep.subr.mxu0 0.0
        %497 = vmatpush1.msra.mxu0 0.0
        %498 = vmatprep.subr.mxu0 0.0
        %499 = vmatpush1.msra.mxu0 0.0
        %500 = vmatprep.subr.mxu0 0.0
        %501 = vmatpush1.msra.mxu0 0.0
        %502 = vmatprep.subr.mxu0 0.0
        %503 = vmatpush1.msra.mxu0 0.0
        %504 = vmatprep.subr.mxu0 0.0
        %505 = vmatpush1.msra.mxu0 0.0
        %506 = vmatprep.subr.mxu0 0.0
        %507 = vmatpush1.msra.mxu0 0.0
        %508 = vmatprep.subr.mxu0 0.0
        %509 = vmatpush1.msra.mxu0 0.0
        %510 = vmatprep.subr.mxu0 0.0
        %511 = vmatpush1.msra.mxu0 0.0
        %512 = vmatprep.subr.mxu0 0.0
        %513 = vmatpush1.msra.mxu0 0.0
        %514 = vmatprep.subr.mxu0 0.0
        %515 = vmatpush1.msra.mxu0 0.0
        %516 = vmatprep.subr.mxu0 0.0
        %517 = vmatpush1.msra.mxu0 0.0
        %518 = vmatprep.subr.mxu0 0.0
        %519 = vmatpush1.msra.mxu0 0.0
        %520 = vmatprep.mubr.f32.mxu0 0.0
        %521 = vmatmul.mubr.f32.gmra.mrb[0].mxu0 %v454
        %v522 = vpop.f32.mrb[0].mxu0
        %v523 = vadd.f32 0.0, %v522
        %v524 = vpop.f32.mrb[0].mxu0
        %525 = vdwg.mxu0
        %526 = vst.msk [vmem:[%s346] sm:$0xff] %vm363, %v523
        %s527 = sand.u32 %s157, 1
        %s528 = scalar_lea.sflag [#allocation4], %s527
        %s529 = sand.u32 %s157, 1
        %s530 = smul.addr %s529, 8
        %s531 = scalar_lea.vmem [#allocation8], %s530
        %s532 = sand.u32 %s185, 1
        %s533 = scalar_lea.sflag [#allocation10], %s532
        %s534 = sand.u32 %s185, 1
        %s535 = smul.addr %s534, 8
        %s536 = scalar_lea.vmem [#allocation9], %s535
        // Predicated region
        $region49: #{_sdpa_pallas.1} parent=35 // pred_check
          %p537 = pneg %p167
        $region50: #{_sdpa_pallas.1} parent=35 // pred_check_branch
          %539 = sbr.rel (%p537) target = $region52
        $region51: #{_sdpa_pallas.1} parent=35 // pred_region
          %s541 = ssub.s32 128, 128
          %542 = vsyncadd %s528, %s541
          %s543 = sadd.s32 %s34, %s33
          %s544 = smul.addr %s543, 128
          %s545 = scalar_lea.hbm %s4, %s544
          %s547 = sshll.u32 %s531, 4
          %s548 = int_to_ptr.vmem [resolvable:$true] %s547
          %550 = dma.vmem_to_hbm [thread:$0]  %s548, 128, %s545, %s528
        $region52: #{_sdpa_pallas.1} parent=35 // pred_fallthru
          _
        // Predicated region
        $region53: #{_sdpa_pallas.1} parent=35 // pred_check
          %p551 = pneg %p195
        $region54: #{_sdpa_pallas.1} parent=35 // pred_check_branch
          %553 = sbr.rel (%p551) target = $region56
        $region55: #{_sdpa_pallas.1} parent=35 // pred_region
          %s555 = ssub.s32 128, 128
          %556 = vsyncadd %s533, %s555
          %s557 = sadd.s32 %s34, %s33
          %s558 = smul.addr %s557, 128
          %s559 = scalar_lea.hbm %s5, %s558
          %s561 = sshll.u32 %s536, 4
          %s562 = int_to_ptr.vmem [resolvable:$true] %s561
          %564 = dma.vmem_to_hbm [thread:$0]  %s562, 128, %s559, %s533
        $region56: #{_sdpa_pallas.1} parent=35 // pred_fallthru
          _
      $region36: #{_sdpa_pallas.1} parent=5 // pred_fallthru
        _
      %p565 = scmp.le.s32.totalorder 2, %s24
      // Predicated region
      $region57: #{_sdpa_pallas.1} parent=5 // pred_check
        %p566 = pneg %p565
      $region58: #{_sdpa_pallas.1} parent=5 // pred_check_branch
        %568 = sbr.rel (%p566) target = $region60
      $region59: #{_sdpa_pallas.1} parent=5 // pred_region
        %s569 = ssub.s32 %s24, 2
        // Predicated region
        $region61: #{_sdpa_pallas.1} parent=59 // pred_check
          %p570 = pneg %p173
        $region62: #{_sdpa_pallas.1} parent=59 // pred_check_branch
          %572 = sbr.rel (%p570) target = $region64
        $region63: #{_sdpa_pallas.1} parent=59 // pred_region
          %s573 = sand.u32 %s158, 1
          %s574 = scalar_lea.sflag [#allocation4], %s573
          %s575 = sand.u32 %s158, 1
          %s576 = smul.addr %s575, 8
          %s577 = scalar_lea.vmem [#allocation8], %s576
          %578 = dma.done %s574, 128
        $region64: #{_sdpa_pallas.1} parent=59 // pred_fallthru
          _
        // Predicated region
        $region65: #{_sdpa_pallas.1} parent=59 // pred_check
          %p579 = pneg %p201
        $region66: #{_sdpa_pallas.1} parent=59 // pred_check_branch
          %581 = sbr.rel (%p579) target = $region68
        $region67: #{_sdpa_pallas.1} parent=59 // pred_region
          %s582 = sand.u32 %s186, 1
          %s583 = scalar_lea.sflag [#allocation10], %s582
          %s584 = sand.u32 %s186, 1
          %s585 = smul.addr %s584, 8
          %s586 = scalar_lea.vmem [#allocation9], %s585
          %587 = dma.done %s583, 128
        $region68: #{_sdpa_pallas.1} parent=59 // pred_fallthru
          _
      $region60: #{_sdpa_pallas.1} parent=5 // pred_fallthru
        _
    $region6: #{_sdpa_pallas.1} parent=1 // loop_footer
      %s28 = sadd.s32 1, %s24
    $region7: #{_sdpa_pallas.1} parent=1 // loop_footer_branch
      %23 = sbr.rel target = $region3
    $region8: #{_sdpa_pallas.1} parent=1 // loop_exit
      _
    %588 = vsyncpa [#allocation3], 1
    %s589 = scalar_lea.sflag [#allocation3], 1
    %590 = vsyncpa %s589, 1
    %591 = vsyncpa [#allocation6], 1
    %s592 = scalar_lea.sflag [#allocation6], 1
    %593 = vsyncpa %s592, 1
    %594 = vsyncpa [#allocation4], 1
    %s595 = scalar_lea.sflag [#allocation4], 1
    %596 = vsyncpa %s595, 1
    %597 = vsyncpa [#allocation10], 1
    %s598 = scalar_lea.sflag [#allocation10], 1
    %599 = vsyncpa %s598, 1

</llo_original>
